<compile_context>
chip_gen: v7x
topology: tpu7x:2x2x1
jax: 0.10.0
libtpu: 0.0.40
codegen_flags: <defaults>
</compile_context>

<pallas_src>
import jax
import jax.numpy as jnp
from jax import lax
from jax.experimental import pallas as pl
from jax.experimental.pallas import tpu as pltpu


def local_pos_enc_kernel(sym_ref, x_ref, erows_ref, elast_ref, o_ref):
    # sym_ref   : SMEM (1,) int32   — scalar-prefetched separator index
    # x_ref     : VMEM (Bb, Sb, W)  — input tile (batch block x sequence block)
    # erows_ref : VMEM (Sb, W)      — embedding rows for this sequence block
    # elast_ref : VMEM (1, W)       — embedding[L-1] ("action" row)
    # o_ref     : VMEM (Bb, Sb, W)  — output tile (aliases the input buffer)
    sym = sym_ref[0]
    _, Sb, W = x_ref.shape
    s0 = pl.program_id(1) * Sb                       # global seq offset of tile

    erows = erows_ref[...]                           # (Sb, W), inputs.dtype
    elast = jnp.broadcast_to(elast_ref[...], (Sb, W))

    # Lane-dense VPU select: (Sb, W) everywhere, no MXU one-hot, no gather,
    # no concatenate temporaries.
    s_iota = s0 + lax.broadcasted_iota(jnp.int32, (Sb, W), 0)
    pos = jnp.where(
        s_iota < sym, erows,
        jnp.where(s_iota == sym, jnp.zeros_like(erows), elast))

    # Native-dtype broadcast add over the batch block (mostly hidden under DMA).
    o_ref[...] = (x_ref[...] + pos[None, :, :]).astype(o_ref.dtype)


def _largest_divisor_leq(n, cap):
    cap = max(1, min(n, int(cap)))
    for d in range(cap, 0, -1):
        if n % d == 0:
            return d
    return 1


def local_position_encoding(inputs, embedding, sym_index, *,
                            tile_budget_bytes=2 * 1024 * 1024):
    """inputs: (B, S, W); embedding: (L, W); sym_index: static Python int."""
    B, S, W = inputs.shape
    L, We = embedding.shape
    if We != W:
        raise ValueError("embedding width must match layer width")
    sym_index = int(sym_index)
    # Same preconditions the PyTorch module requires (it would raise on OOB
    # embedding indices / negative arange sizes).
    if not (0 <= sym_index < S):
        raise ValueError("sym_index must be in [0, S)")
    if sym_index > L or L < 1:
        raise ValueError("sym_index must be <= local_position_encoding_size")

    itemsize = jnp.dtype(inputs.dtype).itemsize
    bytes_per_b = S * W * itemsize

    if bytes_per_b <= tile_budget_bytes:
        # Batch-folded path: one block covers (Bb, S, W).
        Sb = S
        Bb = min(B, max(1, tile_budget_bytes // bytes_per_b))
        if B >= 2:
            # Keep >= 2 steps on the "parallel" batch axis so both v7x
            # TensorCores stream; costs only ~0.35 us on 1-TC chips.
            Bb = min(Bb, pl.cdiv(B, 2))
        Bb = _largest_divisor_leq(B, Bb)          # unragged -> unmasked stores
    else:
        # Sequence-tiling path: a single batch row is too big for one tile.
        Bb = 1
        pack = {4: 8, 2: 16, 1: 32}.get(itemsize, 8)   # sublane packing
        rows = (tile_budget_bytes // max(1, W * itemsize)) // pack * pack
        Sb = min(S, max(pack, rows))
        if S % Sb:                                 # prefer a divisor of S
            for cand in range(Sb, pack - 1, -pack):
                if S % cand == 0:
                    Sb = cand
                    break

    grid_b = pl.cdiv(B, Bb)
    grid_s = pl.cdiv(S, Sb)
    S_pad = grid_s * Sb

    # Per-position embedding rows, padded to the tiled length with the last
    # ("action") row. Positions >= sym_index never read their own row, so the
    # padding value is irrelevant (sym_index <= L is enforced above). This is
    # O(S*W) wrapper-side plumbing; the O(B*S*W) streaming stays in the kernel.
    emb_last = embedding[L - 1:L, :]
    if L >= S_pad:
        emb_rows = embedding[:S_pad, :]
    else:
        emb_rows = jnp.concatenate(
            [embedding, jnp.broadcast_to(emb_last, (S_pad - L, W))], axis=0)
    emb_rows = emb_rows.astype(inputs.dtype)       # native-dtype add in-kernel
    emb_last = emb_last.astype(inputs.dtype)

    sym = jnp.asarray([sym_index], dtype=jnp.int32)

    return pl.pallas_call(
        local_pos_enc_kernel,
        out_shape=jax.ShapeDtypeStruct((B, S, W), inputs.dtype),
        grid_spec=pltpu.PrefetchScalarGridSpec(
            num_scalar_prefetch=1,
            grid=(grid_b, grid_s),
            in_specs=[
                pl.BlockSpec((Bb, Sb, W), lambda b, s, sym_ref: (b, s, 0)),
                pl.BlockSpec((Sb, W),     lambda b, s, sym_ref: (s, 0)),
                pl.BlockSpec((1, W),      lambda b, s, sym_ref: (0, 0)),
            ],
            out_specs=pl.BlockSpec((Bb, Sb, W), lambda b, s, sym_ref: (b, s, 0)),
        ),
        # Operand 0 is the scalar-prefetch `sym`; `inputs` is operand 1 and is
        # aliased to the output (pure in-place add). NOTE: this donates
        # `inputs`; callers must not reuse it after the call under jit.
        input_output_aliases={1: 0},
        compiler_params=pltpu.CompilerParams(
            dimension_semantics=("parallel", "parallel"),
            vmem_limit_bytes=32 * 1024 * 1024),
    )(sym, inputs, emb_rows, emb_last)


def reference(inputs, embedding, sym_index):
    # Pure-JAX mirror of the PyTorch forward (for verification only).
    S = inputs.shape[-2]
    L, W = embedding.shape
    pos_ob = jnp.arange(sym_index, dtype=jnp.int32)
    pos_ac = jnp.full((S - sym_index - 1,), L - 1, dtype=jnp.int32)
    emd_ob = embedding[pos_ob]
    emd_ac = embedding[pos_ac]
    emd_sep = jnp.zeros((1, W), dtype=embedding.dtype)
    pos_emd = jnp.concatenate([emd_ob, emd_sep, emd_ac], axis=0)
    return inputs + pos_emd


if __name__ == "__main__":
    key = jax.random.PRNGKey(0)
    k_in, k_emb, k_in2 = jax.random.split(key, 3)

    # Case 1: config-implied small shapes (batch-folded path).
    #   local_position_encoding_size L = 16, layer_width W = 128,
    #   batch B = 2, sequence S = 8, sym_index = 5.
    B, S, W, L = 2, 8, 128, 16
    sym_index = 5
    inputs = jax.random.normal(k_in, (B, S, W), dtype=jnp.float32)
    embedding = jax.random.normal(k_emb, (L, W), dtype=jnp.float32)
    emb_saved = jnp.array(embedding)              # guard: must not be clobbered

    ref = reference(inputs, embedding, sym_index)  # BEFORE the aliased call
    out = jax.block_until_ready(local_position_encoding(inputs, embedding, sym_index))
    assert out.shape == (B, S, W) and out.dtype == jnp.float32
    assert jnp.allclose(out, ref, atol=1e-5, rtol=1e-5)
    # Alias-index sanity: the embedding table was not the aliased operand.
    assert jnp.allclose(embedding, emb_saved)

    # Case 2: force the sequence-tiling path (tiny tile budget) with a ragged
    # last sequence tile, S > L, and the separator inside a middle tile.
    B2, S2, sym2 = 2, 20, 7
    inputs2 = jax.random.normal(k_in2, (B2, S2, W), dtype=jnp.float32)
    ref2 = reference(inputs2, embedding, sym2)
    out2 = jax.block_until_ready(
        local_position_encoding(inputs2, embedding, sym2, tile_budget_bytes=4096))
    assert out2.shape == (B2, S2, W)
    assert jnp.allclose(out2, ref2, atol=1e-5, rtol=1e-5)

    print("KERNEL_OK")
</pallas_src>

<mosaic_0001>
module attributes {stable_mosaic.version = 11 : i64} {
  func.func @local_pos_enc_kernel(%arg0: i32, %arg1: i32, %arg2: memref<1xi32, #tpu.memory_space<smem>>, %arg3: memref<1x8x128xf32, #tpu.memory_space<vmem>>, %arg4: memref<8x128xf32, #tpu.memory_space<vmem>>, %arg5: memref<1x128xf32, #tpu.memory_space<vmem>>, %arg6: memref<1x8x128xf32, #tpu.memory_space<vmem>>) attributes {dimension_semantics = [#tpu.dimension_semantics<parallel>, #tpu.dimension_semantics<parallel>], iteration_bounds = array<i64: 2, 1>, scalar_prefetch = 1 : i64, scratch_operands = 0 : i64, tpu.core_type = #tpu.core_type<tc>, window_params = [{transform_indices = @transform_0, window_bounds = array<i64: 1, 8, 128>}, {transform_indices = @transform_1, window_bounds = array<i64: 8, 128>}, {pipeline_mode = #tpu.pipeline_mode<synchronous>, transform_indices = @transform_2, window_bounds = array<i64: 1, 128>}, {transform_indices = @transform_3, window_bounds = array<i64: 1, 8, 128>}]} {
    %c0 = arith.constant 0 : index
    %0 = memref.load %arg2[%c0] : memref<1xi32, #tpu.memory_space<smem>>
    %c8_i32 = arith.constant 8 : i32
    %1 = arith.muli %arg1, %c8_i32 : i32
    %c0_0 = arith.constant 0 : index
    %c0_1 = arith.constant 0 : index
    %2 = vector.load %arg4[%c0_0, %c0_1] : memref<8x128xf32, #tpu.memory_space<vmem>>, vector<8x128xf32>
    %c0_2 = arith.constant 0 : index
    %c0_3 = arith.constant 0 : index
    %3 = vector.load %arg5[%c0_2, %c0_3] : memref<1x128xf32, #tpu.memory_space<vmem>>, vector<1x128xf32>
    %4 = vector.shape_cast %3 : vector<1x128xf32> to vector<1x128xf32>
    %5 = vector.broadcast %4 : vector<1x128xf32> to vector<8x128xf32>
    %6 = tpu.iota {dimensions = array<i32: 0>} : vector<8x128xi32>
    %7 = vector.broadcast %1 : i32 to vector<8x128xi32>
    %8 = arith.addi %7, %6 : vector<8x128xi32>
    %9 = vector.broadcast %0 : i32 to vector<8x128xi32>
    %10 = arith.cmpi slt, %8, %9 : vector<8x128xi32>
    %11 = vector.broadcast %0 : i32 to vector<8x128xi32>
    %12 = arith.cmpi eq, %8, %11 : vector<8x128xi32>
    %cst = arith.constant 0.000000e+00 : f32
    %13 = vector.broadcast %cst : f32 to vector<8x128xf32>
    %14 = arith.select %12, %13, %5 : vector<8x128xi1>, vector<8x128xf32>
    %15 = arith.select %10, %2, %14 : vector<8x128xi1>, vector<8x128xf32>
    %c0_4 = arith.constant 0 : index
    %c0_5 = arith.constant 0 : index
    %c0_6 = arith.constant 0 : index
    %16 = vector.load %arg3[%c0_4, %c0_5, %c0_6] : memref<1x8x128xf32, #tpu.memory_space<vmem>>, vector<1x8x128xf32>
    %17 = vector.shape_cast %15 : vector<8x128xf32> to vector<1x8x128xf32>
    %18 = arith.addf %16, %17 : vector<1x8x128xf32>
    %c0_7 = arith.constant 0 : index
    %c0_8 = arith.constant 0 : index
    %c0_9 = arith.constant 0 : index
    %19 = vector.load %arg6[%c0_7, %c0_8, %c0_9] : memref<1x8x128xf32, #tpu.memory_space<vmem>>, vector<1x8x128xf32>
    tpu.vector_store %arg6[%c0_7, %c0_8, %c0_9], %18 {strides = array<i32>} : memref<1x8x128xf32, #tpu.memory_space<vmem>>, vector<1x8x128xf32>,
    return
  }
  func.func @transform_0(%arg0: i32, %arg1: i32, %arg2: memref<1xi32, #tpu.memory_space<smem>>) -> (i32, i32, i32) {
    %c0_i32 = arith.constant 0 : i32
    %c0_i32_0 = arith.constant 0 : i32
    return %arg0, %arg1, %c0_i32 : i32, i32, i32
  }
  func.func @transform_1(%arg0: i32, %arg1: i32, %arg2: memref<1xi32, #tpu.memory_space<smem>>) -> (i32, i32) {
    %c0_i32 = arith.constant 0 : i32
    %c0_i32_0 = arith.constant 0 : i32
    return %arg1, %c0_i32 : i32, i32
  }
  func.func @transform_2(%arg0: i32, %arg1: i32, %arg2: memref<1xi32, #tpu.memory_space<smem>>) -> (i32, i32) {
    %c0_i32 = arith.constant 0 : i32
    %c0_i32_0 = arith.constant 0 : i32
    %c0_i32_1 = arith.constant 0 : i32
    return %c0_i32, %c0_i32_0 : i32, i32
  }
  func.func @transform_3(%arg0: i32, %arg1: i32, %arg2: memref<1xi32, #tpu.memory_space<smem>>) -> (i32, i32, i32) {
    %c0_i32 = arith.constant 0 : i32
    %c0_i32_0 = arith.constant 0 : i32
    return %arg0, %arg1, %c0_i32 : i32, i32, i32
  }
}

</mosaic_0001>

<llo_original>
// kernel: tpu_custom_call.1
$region0: #{tpu_custom_call.1}
  #allocation0 [shape = 'u32[]', space=smem, size = 0x4, offset = 0x4, fixed_abs, tag = 'smem constant byte address 0x4 - core index']
  #allocation1 [shape = 'u32[144,128]{1,0:T(1,128)}', space=vmem, size = 0x12000, scoped, tag = 'internal scratch']
  #allocation2 [shape = 's32[1]{0}', space=sflag, size = 0x4, scoped, tag = 'scoped memory for tpu_custom_call.1']
  #allocation3 [shape = 's32[1]{0:T(128)S(6)}', space=smem, size = 0x200, scoped, tag = 'prefetched SMEM operand 0']
  %s0 = inlined_call_operand.<no memory space> [shape: s32[1], index: 0, kind: input, shape index: {}]
  %s1 = inlined_call_operand.hbm [shape: f32[2,8,128], index: 1, kind: input, shape index: {}, may-alias: {1,4}]
  %s2 = inlined_call_operand.vmem [shape: f32[8,128], index: 2, kind: input, shape index: {}]
  %s3 = inlined_call_operand.vmem [shape: f32[1,128], index: 3, kind: input, shape index: {}]
  %s4 = inlined_call_operand.hbm [shape: f32[2,8,128], index: 4, kind: output, shape index: {}, may-alias: {1,4}]
  %s5 = sld [smem:[#allocation0]]
  $region49: #{tpu_custom_call.1} parent=0
    _
  %s7 = ssub.s32 1, %s5
  %s8 = scalar_select 0, %s7, %s5
  %9 = sst [smem:[#allocation3]] %s0
  $region1: #{tpu_custom_call.1} parent=0
    #allocation4 [shape = 'u8[8192]{0}', space=vmem, size = 0x2000, scoped, tag = 'input window, operand 1']
    #allocation5 [shape = 's32[2]{0}', space=sflag, size = 0x8, scoped, tag = 'scoped memory for tpu_custom_call.1']
    #allocation6 [shape = 's32[2]{0}', space=sflag, size = 0x8, scoped, tag = 'scoped memory for tpu_custom_call.1']
    #allocation7 [shape = 'u8[8192]{0}', space=vmem, size = 0x2000, scoped, tag = 'output window, operand 0']
    %10 = vsyncpa [#allocation5], 0
    %s11 = scalar_lea.sflag [#allocation5], 1
    %12 = vsyncpa %s11, 0
    %13 = vsyncpa [#allocation6], 0
    %s14 = scalar_lea.sflag [#allocation6], 1
    %15 = vsyncpa %s14, 0
    loop: start=0, step=1, limit=4
    $region2: #{tpu_custom_call.1} parent=1 // loop_pre_header
      _
    $region3: #{tpu_custom_call.1} parent=1 // loop_header
      %s17 = sphi 0, %s21
      %p18 = scmp.ge.s32.totalorder %s17, 4
      %s24 = sphi 0, %s36
      %s25 = sphi 0, %s32
      %s26 = sphi 0, %s24
      %s27 = sphi 0, %s25
      %s28 = sphi 0, %s26
      %s29 = sphi 0, %s27
      %s41 = sphi 0, %s43
      %s44 = sphi 0, %s41
      %s45 = sphi 0, %s44
      %s61 = sphi 0, %s45
      %s67 = sphi 0, %s69
      %s70 = sphi 0, %s67
      %s71 = sphi 0, %s70
      %s87 = sphi 0, %s71
      %s91 = sphi 0, %s91
      %s93 = sphi 0, %s91
      %s94 = sphi 0, %s93
      %s108 = sphi 0, %s94
      %s116 = sphi 0, %s118
      %s119 = sphi 0, %s116
      %s120 = sphi 0, %s119
      %s136 = sphi 0, %s120
    $region4: #{tpu_custom_call.1} parent=1 // loop_header_branch
      %20 = sbr.rel (%p18) target = $region8
    $region5: #{tpu_custom_call.1} parent=1 // loop_body
      %s22 = ssub.s32 %s17, 1
      %s23 = ssub.s32 %s17, 2
      %s30 = sadd.s32 1, %s25
      %p31 = scmp.ge.s32.totalorder %s30, 1
      %s32 = scalar_select %p31, 0, %s30
      %s33 = sadd.s32 1, %s24
      %s34 = scalar_select %p31, %s33, %s24
      %p35 = scmp.ge.s32.totalorder %s34, 2
      %s36 = scalar_select %p35, 0, %s34
      %s37 = ssub.s32 %s24, %s36
      %s38 = ssub.s32 %s25, %s32
      %s39 = sor.u32 %s37, %s38
      %p40 = scmp.eq.s32.totalorder %s39, 0
      %s42 = sadd.s32 %s41, 1
      %s43 = scalar_select %p40, %s41, %s42
      %p46 = pneg %p40
      %p47 = scmp.eq.s32.totalorder %s17, 1
      %p48 = por %p46, %p47
      %p49 = scmp.ne.s32.totalorder %s41, %s44
      %p50 = scmp.eq.s32.totalorder %s17, 0
      %p51 = por %p49, %p50
      %p52 = scmp.ne.s32.totalorder %s41, %s44
      %p53 = scmp.eq.s32.totalorder %s22, 1
      %p54 = por %p52, %p53
      %p55 = scmp.ne.s32.totalorder %s44, %s45
      %p56 = scmp.eq.s32.totalorder %s22, 0
      %p57 = por %p55, %p56
      %p58 = scmp.ne.s32.totalorder %s44, %s45
      %p59 = scmp.eq.s32.totalorder %s23, 1
      %p60 = por %p58, %p59
      %p62 = scmp.ne.s32.totalorder %s45, %s61
      %p63 = scmp.eq.s32.totalorder %s23, 0
      %p64 = por %p62, %p63
      %s65 = ssub.s32 %s25, %s32
      %p66 = scmp.eq.s32.totalorder %s65, 0
      %s68 = sadd.s32 %s67, 1
      %s69 = scalar_select %p66, %s67, %s68
      %p72 = pneg %p66
      %p73 = scmp.eq.s32.totalorder %s17, 1
      %p74 = por %p72, %p73
      %p75 = scmp.ne.s32.totalorder %s67, %s70
      %p76 = scmp.eq.s32.totalorder %s17, 0
      %p77 = por %p75, %p76
      %p78 = scmp.ne.s32.totalorder %s67, %s70
      %p79 = scmp.eq.s32.totalorder %s22, 1
      %p80 = por %p78, %p79
      %p81 = scmp.ne.s32.totalorder %s70, %s71
      %p82 = scmp.eq.s32.totalorder %s22, 0
      %p83 = por %p81, %p82
      %p84 = scmp.ne.s32.totalorder %s70, %s71
      %p85 = scmp.eq.s32.totalorder %s23, 1
      %p86 = por %p84, %p85
      %p88 = scmp.ne.s32.totalorder %s71, %s87
      %p89 = scmp.eq.s32.totalorder %s23, 0
      %p90 = por %p88, %p89
      %s92 = sadd.s32 %s91, 1
      %p95 = scmp.eq.s32.totalorder %s17, 1
      %p96 = scmp.ne.s32.totalorder %s91, %s93
      %p97 = scmp.eq.s32.totalorder %s17, 0
      %p98 = por %p96, %p97
      %p99 = scmp.ne.s32.totalorder %s91, %s93
      %p100 = scmp.eq.s32.totalorder %s22, 1
      %p101 = por %p99, %p100
      %p102 = scmp.ne.s32.totalorder %s93, %s94
      %p103 = scmp.eq.s32.totalorder %s22, 0
      %p104 = por %p102, %p103
      %p105 = scmp.ne.s32.totalorder %s93, %s94
      %p106 = scmp.eq.s32.totalorder %s23, 1
      %p107 = por %p105, %p106
      %p109 = scmp.ne.s32.totalorder %s94, %s108
      %p110 = scmp.eq.s32.totalorder %s23, 0
      %p111 = por %p109, %p110
      %s112 = ssub.s32 %s24, %s36
      %s113 = ssub.s32 %s25, %s32
      %s114 = sor.u32 %s112, %s113
      %p115 = scmp.eq.s32.totalorder %s114, 0
      %s117 = sadd.s32 %s116, 1
      %s118 = scalar_select %p115, %s116, %s117
      %p121 = pneg %p115
      %p122 = scmp.eq.s32.totalorder %s17, 1
      %p123 = por %p121, %p122
      %p124 = scmp.ne.s32.totalorder %s116, %s119
      %p125 = scmp.eq.s32.totalorder %s17, 0
      %p126 = por %p124, %p125
      %p127 = scmp.ne.s32.totalorder %s116, %s119
      %p128 = scmp.eq.s32.totalorder %s22, 1
      %p129 = por %p127, %p128
      %p130 = scmp.ne.s32.totalorder %s119, %s120
      %p131 = scmp.eq.s32.totalorder %s22, 0
      %p132 = por %p130, %p131
      %p133 = scmp.ne.s32.totalorder %s119, %s120
      %p134 = scmp.eq.s32.totalorder %s23, 1
      %p135 = por %p133, %p134
      %p137 = scmp.ne.s32.totalorder %s120, %s136
      %p138 = scmp.eq.s32.totalorder %s23, 0
      %p139 = por %p137, %p138
      %p140 = scmp.le.s32.totalorder 1, %s17
      %p141 = scmp.lt.s32.totalorder %s17, 3
      %p142 = pnand %p140, %p141
      %p143 = pneg %p142
      // Predicated region
      $region9: #{tpu_custom_call.1} parent=5 // pred_check
        _
      $region10: #{tpu_custom_call.1} parent=5 // pred_check_branch
        %145 = sbr.rel (%p142) target = $region12
      $region11: #{tpu_custom_call.1} parent=5 // pred_region
        %s146 = ssub.s32 %s17, 1
        // Predicated region
        $region13: #{tpu_custom_call.1} parent=11 // pred_check
          %p147 = pneg %p83
        $region14: #{tpu_custom_call.1} parent=11 // pred_check_branch
          %149 = sbr.rel (%p147) target = $region16
        $region15: #{tpu_custom_call.1} parent=11 // pred_region
          %p150 = scmp.lt.s32.totalorder %s27, 0
          %s151 = scalar_select %p150, %s27, 0
          %s152 = smul.addr %s151, 8
          %s153 = scalar_lea.vmem %s2, %s152
        $region16: #{tpu_custom_call.1} parent=11 // pred_fallthru
          _
        // Predicated region
        $region17: #{tpu_custom_call.1} parent=11 // pred_check
          %p154 = pneg %p104
        $region18: #{tpu_custom_call.1} parent=11 // pred_check_branch
          %156 = sbr.rel (%p154) target = $region20
        $region19: #{tpu_custom_call.1} parent=11 // pred_region
          _
        $region20: #{tpu_custom_call.1} parent=11 // pred_fallthru
          _
      $region12: #{tpu_custom_call.1} parent=5 // pred_fallthru
        _
      %p157 = scmp.lt.s32.totalorder %s17, 2
      // Predicated region
      $region21: #{tpu_custom_call.1} parent=5 // pred_check
        %p158 = pneg %p157
      $region22: #{tpu_custom_call.1} parent=5 // pred_check_branch
        %160 = sbr.rel (%p158) target = $region24
      $region23: #{tpu_custom_call.1} parent=5 // pred_region
        // Predicated region
        $region25: #{tpu_custom_call.1} parent=23 // pred_check
          %p161 = pneg %p51
        $region26: #{tpu_custom_call.1} parent=23 // pred_check_branch
          %163 = sbr.rel (%p161) target = $region28
        $region27: #{tpu_custom_call.1} parent=23 // pred_region
          %s164 = sand.u32 %s41, 1
          %s165 = scalar_lea.sflag [#allocation5], %s164
          %s166 = sand.u32 %s41, 1
          %s167 = smul.addr %s166, 8
          %s168 = scalar_lea.vmem [#allocation4], %s167
          %s170 = ssub.s32 128, 128
          %171 = vsyncadd %s165, %s170
          %s172 = sadd.s32 %s25, %s24
          %s173 = smul.addr %s172, 128
          %s174 = scalar_lea.hbm %s1, %s173
          %s176 = sshll.u32 %s168, 4
          %s177 = int_to_ptr.vmem [resolvable:$true] %s176
          %179 = dma.hbm_to_vmem [thread:$0]  %s174, 128, %s177, %s165
        $region28: #{tpu_custom_call.1} parent=23 // pred_fallthru
          _
      $region24: #{tpu_custom_call.1} parent=5 // pred_fallthru
        _
      %p180 = scmp.le.s32.totalorder 1, %s17
      %p181 = scmp.lt.s32.totalorder %s17, 3
      %p182 = pnand %p180, %p181
      %p183 = pneg %p182
      // Predicated region
      $region29: #{tpu_custom_call.1} parent=5 // pred_check
        _
      $region30: #{tpu_custom_call.1} parent=5 // pred_check_branch
        %185 = sbr.rel (%p182) target = $region32
      $region31: #{tpu_custom_call.1} parent=5 // pred_region
        %s186 = ssub.s32 %s17, 1
        %s187 = sand.u32 %s44, 1
        %s188 = scalar_lea.sflag [#allocation5], %s187
        %s189 = sand.u32 %s44, 1
        %s190 = smul.addr %s189, 8
        %s191 = scalar_lea.vmem [#allocation4], %s190
        // Predicated region
        $region33: #{tpu_custom_call.1} parent=31 // pred_check
          %p192 = pneg %p57
        $region34: #{tpu_custom_call.1} parent=31 // pred_check_branch
          %194 = sbr.rel (%p192) target = $region36
        $region35: #{tpu_custom_call.1} parent=31 // pred_region
          %195 = dma.done %s188, 128
        $region36: #{tpu_custom_call.1} parent=31 // pred_fallthru
          _
        %s196 = sand.u32 %s44, 1
        %s197 = scalar_lea.sflag [#allocation5], %s196
        %s198 = sand.u32 %s44, 1
        %s199 = smul.addr %s198, 8
        %s200 = scalar_lea.vmem [#allocation4], %s199
        %p201 = pneg %p57
        %p202 = pneg %p54
        %p203 = scmp.lt.s32.totalorder %s27, 0
        %s204 = scalar_select %p203, %s27, 0
        %s205 = smul.addr %s204, 8
        %s206 = scalar_lea.vmem %s2, %s205
        %p207 = pneg %p83
        %p208 = pneg %p80
        %p209 = pneg %p104
        %p210 = pneg %p101
        %p211 = pneg %p132
        %p212 = pneg %p129
        %s213 = sand.u32 %s119, 1
        %s214 = scalar_lea.sflag [#allocation6], %s213
        %s215 = sand.u32 %s119, 1
        %s216 = smul.addr %s215, 8
        %s217 = scalar_lea.vmem [#allocation7], %s216
        %p218 = scmp.lt.s32.totalorder %s27, 0
        %s219 = scalar_select %p218, %s27, 0
        %s220 = smul.addr %s219, 8
        %s221 = scalar_lea.vmem %s2, %s220
        %s222 = sld [smem:[#allocation3]]
        %s223 = smul.u32 %s27, 8
        %v224 = vld [vmem:[%s221] sm:$0xff]
        %v225 = vld [vmem:[%s3] sm:$0x1]
        %v227 = vlaneseq
        %v228 = vshrl.u32 %v227, 7
        %v229 = vsub.s32 0, %v228
        %v230 = vrot.slane %v225, %v229
        %v232 = vlaneseq
        %v233 = vshrl.u32 %v232, 7
        %v234 = vstv %s223
        %v235 = vadd.s32 %v234, %v233
        %v236 = vstv %s222
        %vm237 = vcmp.lt.s32.totalorder %v235, %v236
        %vm238 = vcmp.eq.s32.totalorder %v235, %v236
        %v239 = vsel %vm238, 0.0, %v230
        %v240 = vsel %vm237, %v224, %v239
        %v241 = vld [vmem:[%s191] sm:$0xff]
        %v242 = vadd.f32 %v241, %v240
        %243 = vst [vmem:[%s217] sm:$0xff] %v242
        %s244 = sand.u32 %s119, 1
        %s245 = scalar_lea.sflag [#allocation6], %s244
        %s246 = sand.u32 %s119, 1
        %s247 = smul.addr %s246, 8
        %s248 = scalar_lea.vmem [#allocation7], %s247
        // Predicated region
        $region37: #{tpu_custom_call.1} parent=31 // pred_check
          %p249 = pneg %p129
        $region38: #{tpu_custom_call.1} parent=31 // pred_check_branch
          %251 = sbr.rel (%p249) target = $region40
        $region39: #{tpu_custom_call.1} parent=31 // pred_region
          %s253 = ssub.s32 128, 128
          %254 = vsyncadd %s245, %s253
          %s255 = sadd.s32 %s27, %s26
          %s256 = smul.addr %s255, 128
          %s257 = scalar_lea.hbm %s4, %s256
          %s259 = sshll.u32 %s248, 4
          %s260 = int_to_ptr.vmem [resolvable:$true] %s259
          %262 = dma.vmem_to_hbm [thread:$0]  %s260, 128, %s257, %s245
        $region40: #{tpu_custom_call.1} parent=31 // pred_fallthru
          _
      $region32: #{tpu_custom_call.1} parent=5 // pred_fallthru
        _
      %p263 = scmp.le.s32.totalorder 2, %s17
      // Predicated region
      $region41: #{tpu_custom_call.1} parent=5 // pred_check
        %p264 = pneg %p263
      $region42: #{tpu_custom_call.1} parent=5 // pred_check_branch
        %266 = sbr.rel (%p264) target = $region44
      $region43: #{tpu_custom_call.1} parent=5 // pred_region
        %s267 = ssub.s32 %s17, 2
        // Predicated region
        $region45: #{tpu_custom_call.1} parent=43 // pred_check
          %p268 = pneg %p135
        $region46: #{tpu_custom_call.1} parent=43 // pred_check_branch
          %270 = sbr.rel (%p268) target = $region48
        $region47: #{tpu_custom_call.1} parent=43 // pred_region
          %s271 = sand.u32 %s120, 1
          %s272 = scalar_lea.sflag [#allocation6], %s271
          %s273 = sand.u32 %s120, 1
          %s274 = smul.addr %s273, 8
          %s275 = scalar_lea.vmem [#allocation7], %s274
          %276 = dma.done %s272, 128
        $region48: #{tpu_custom_call.1} parent=43 // pred_fallthru
          _
      $region44: #{tpu_custom_call.1} parent=5 // pred_fallthru
        _
    $region6: #{tpu_custom_call.1} parent=1 // loop_footer
      %s21 = sadd.s32 1, %s17
    $region7: #{tpu_custom_call.1} parent=1 // loop_footer_branch
      %16 = sbr.rel target = $region3
    $region8: #{tpu_custom_call.1} parent=1 // loop_exit
      _
    %277 = vsyncpa [#allocation5], 1
    %s278 = scalar_lea.sflag [#allocation5], 1
    %279 = vsyncpa %s278, 1
    %280 = vsyncpa [#allocation6], 1
    %s281 = scalar_lea.sflag [#allocation6], 1
    %282 = vsyncpa %s281, 1

</llo_original>
